<compile_context>
chip_gen: v5e
topology: v5e:2x2
jax: 0.10.0
libtpu: 0.0.40
codegen_flags: <defaults>
</compile_context>

<pallas_src>
import functools

import jax
import jax.numpy as jnp
from jax.experimental import pallas as pl
from jax.experimental.pallas import tpu as pltpu

NEG_SLOPE = 0.2  # matches nn.LeakyReLU(0.2) in the reference module


def _round_up(x: int, m: int) -> int:
    return (x + m - 1) // m * m


def _cdiv(a: int, b: int) -> int:
    return (a + b - 1) // b


def _leaky_relu(x):
    # slope < 1  =>  LeakyReLU(x) == max(x, slope * x)  (mul + max, no select)
    return jnp.maximum(x, NEG_SLOPE * x)


def _mlp_kernel(z_ref, w1_ref, b1_ref, w2_ref, b2_ref, w3_ref, b3_ref, o_ref):
    """One batch tile: Linear -> LeakyReLU(0.2) -> Linear -> LeakyReLU(0.2) -> Linear."""
    cdt = w1_ref.dtype                      # compute dtype (bf16 or f32)
    z = z_ref[...].astype(cdt)              # cast fused in-kernel (no wrapper copy)

    # Layer 1: MXU matmul with f32 accumulation; bias + LeakyReLU in f32.
    h = jnp.dot(z, w1_ref[...], preferred_element_type=jnp.float32) + b1_ref[...]
    h = _leaky_relu(h)

    # Layer 2.
    h = jnp.dot(h.astype(cdt), w2_ref[...],
                preferred_element_type=jnp.float32) + b2_ref[...]
    h = _leaky_relu(h)

    # Layer 3 (no activation).
    out = jnp.dot(h.astype(cdt), w3_ref[...],
                  preferred_element_type=jnp.float32) + b3_ref[...]
    o_ref[...] = out.astype(o_ref.dtype)


def prepare_params(params, compute_dtype=jnp.bfloat16):
    """One-time parameter prep (hoisted out of the per-call forward).

    Pads the hidden dim up to a multiple of 128 (lane-dense matmuls) and casts
    the matmul operands to `compute_dtype`.  Zero padding is mathematically
    exact through bias-add and LeakyReLU.  Biases stay f32.
    """
    w1, b1 = params["w1"], params["b1"]
    w2, b2 = params["w2"], params["b2"]
    w3, b3 = params["w3"], params["b3"]
    L, H = w1.shape
    Hp = _round_up(H, 128)
    ph = Hp - H
    return {
        "w1": jnp.pad(w1, ((0, 0), (0, ph))).astype(compute_dtype),
        "b1": jnp.pad(b1, ((0, 0), (0, ph))).astype(jnp.float32),
        "w2": jnp.pad(w2, ((0, ph), (0, ph))).astype(compute_dtype),
        "b2": jnp.pad(b2, ((0, 0), (0, ph))).astype(jnp.float32),
        "w3": jnp.pad(w3, ((0, ph), (0, 0))).astype(compute_dtype),
        "b3": b3.astype(jnp.float32),
    }


def _choose_tile_b(B: int, tile_b_max: int):
    """Pick (TILE_B, n_tiles): big MXU-friendly tiles, bounded batch-pad waste,
    and >=2 grid steps when the batch is large enough to split across cores."""
    n_tiles = max(_cdiv(B, tile_b_max), 2 if B >= 512 else 1)
    base = _cdiv(B, n_tiles)
    waste_budget = max(B // 8, 7)           # <=12.5% padded rows (or < one 8-row unit)
    for align in (256, 128, 64, 32, 16, 8):
        tile = _round_up(base, align)
        if n_tiles * tile - B <= waste_budget:
            return tile, n_tiles
    return _round_up(base, 8), n_tiles


@functools.partial(jax.jit, static_argnames=("tile_b", "single_buffer_weights"))
def _forward_impl(z, prepped, *, tile_b, single_buffer_weights):
    B, L = z.shape
    w1, b1 = prepped["w1"], prepped["b1"]
    w2, b2 = prepped["w2"], prepped["b2"]
    w3, b3 = prepped["w3"], prepped["b3"]
    Hp = w1.shape[1]

    TILE_B, n_tiles = _choose_tile_b(B, tile_b)
    Bp = TILE_B * n_tiles
    zp = z if Bp == B else jnp.pad(z, ((0, Bp - B), (0, 0)))

    def resident(shape):
        # Weights/biases are fetched once (constant block index); single-buffer
        # them when the jax version supports pipeline_mode.
        if single_buffer_weights:
            return pl.BlockSpec(shape, lambda i: (0, 0), pipeline_mode=pl.Buffered(1))
        return pl.BlockSpec(shape, lambda i: (0, 0))

    # Explicit VMEM budget: resident weights/biases + double-buffered z/out
    # tiles + f32 intermediate slack.
    n_wbuf = 1 if single_buffer_weights else 2
    wbytes = w1.dtype.itemsize
    weight_bytes = n_wbuf * wbytes * (L * Hp + Hp * Hp + Hp * L)
    bias_bytes = n_wbuf * 4 * (2 * Hp + L)
    io_bytes = 2 * TILE_B * L * 4 * 2                  # double-buffered z + out (f32)
    h_bytes = 3 * TILE_B * Hp * 4                      # live f32 intermediates / casts
    vmem_limit = weight_bytes + bias_bytes + io_bytes + 2 * h_bytes + (4 << 20)
    vmem_limit = min(max(vmem_limit, 16 << 20), 128 << 20)

    out_padded = pl.pallas_call(
        _mlp_kernel,
        out_shape=jax.ShapeDtypeStruct((Bp, L), jnp.float32),
        grid=(n_tiles,),
        in_specs=[
            pl.BlockSpec((TILE_B, L), lambda i: (i, 0)),   # z: streamed per batch tile
            resident((L, Hp)),                             # w1 (resident)
            resident((1, Hp)),                             # b1
            resident((Hp, Hp)),                            # w2
            resident((1, Hp)),                             # b2
            resident((Hp, L)),                             # w3
            resident((1, L)),                              # b3
        ],
        out_specs=pl.BlockSpec((TILE_B, L), lambda i: (i, 0)),
        compiler_params=pltpu.CompilerParams(
            dimension_semantics=("parallel",),
            vmem_limit_bytes=int(vmem_limit)),
    )(zp, w1, b1, w2, b2, w3, b3)

    return out_padded if Bp == B else out_padded[:B]


def latent_encoder_forward(z, prepped_params, *, tile_b=512):
    """z: (B, latent_dim) f32.  prepped_params: output of prepare_params()."""
    try:
        return _forward_impl(z, prepped_params, tile_b=tile_b,
                             single_buffer_weights=True)
    except Exception:
        # Fallback if pipeline_mode=pl.Buffered(1) is unsupported on this jax
        # version: default double-buffered weights (correct, slightly more VMEM).
        return _forward_impl(z, prepped_params, tile_b=tile_b,
                             single_buffer_weights=False)


def init_params(key, latent_dim, hidden_dim):
    """Deterministic init mimicking PyTorch nn.Linear (uniform +/- 1/sqrt(fan_in)).
    Weights stored already transposed to (in, out) for the kernel."""
    def linear(k, fan_in, fan_out):
        kw, kb = jax.random.split(k)
        bound = 1.0 / jnp.sqrt(fan_in)
        w = jax.random.uniform(kw, (fan_in, fan_out), jnp.float32, -bound, bound)
        b = jax.random.uniform(kb, (1, fan_out), jnp.float32, -bound, bound)
        return w, b

    k1, k2, k3 = jax.random.split(key, 3)
    w1, b1 = linear(k1, latent_dim, hidden_dim)
    w2, b2 = linear(k2, hidden_dim, hidden_dim)
    w3, b3 = linear(k3, hidden_dim, latent_dim)
    return {"w1": w1, "b1": b1, "w2": w2, "b2": b2, "w3": w3, "b3": b3}


def reference_forward_bf16(z, p):
    """Pure-JAX reference with the same bf16-operand / f32-accumulate recipe."""
    bf = jnp.bfloat16
    h = jnp.dot(z.astype(bf), p["w1"].astype(bf),
                preferred_element_type=jnp.float32) + p["b1"]
    h = _leaky_relu(h)
    h = jnp.dot(h.astype(bf), p["w2"].astype(bf),
                preferred_element_type=jnp.float32) + p["b2"]
    h = _leaky_relu(h)
    return jnp.dot(h.astype(bf), p["w3"].astype(bf),
                   preferred_element_type=jnp.float32) + p["b3"]


def reference_forward_f32(z, p):
    """Full-precision reference (exact PyTorch-module math)."""
    hi = jax.lax.Precision.HIGHEST
    h = jnp.dot(z, p["w1"], precision=hi) + p["b1"]
    h = _leaky_relu(h)
    h = jnp.dot(h, p["w2"], precision=hi) + p["b2"]
    h = _leaky_relu(h)
    return jnp.dot(h, p["w3"], precision=hi) + p["b3"]


if __name__ == "__main__":
    key = jax.random.PRNGKey(0)
    k_param, k_z = jax.random.split(key)

    batch = 8
    latent_dim = 16
    hidden_dim = 32

    params = init_params(k_param, latent_dim, hidden_dim)
    z = jax.random.normal(k_z, (batch, latent_dim), jnp.float32)

    # One-time parameter prep (done once per model, NOT per forward call).
    prepped_bf16 = prepare_params(params, compute_dtype=jnp.bfloat16)
    prepped_f32 = prepare_params(params, compute_dtype=jnp.float32)

    out_bf16 = jax.block_until_ready(latent_encoder_forward(z, prepped_bf16))
    out_f32 = jax.block_until_ready(latent_encoder_forward(z, prepped_f32))

    ref_bf16 = reference_forward_bf16(z, params)
    ref_f32 = reference_forward_f32(z, params)

    assert out_bf16.shape == (batch, latent_dim)
    assert out_f32.shape == (batch, latent_dim)
    # bf16-operand kernel vs. reference using the exact same recipe: tight.
    assert jnp.allclose(out_bf16, ref_bf16, atol=2e-3, rtol=2e-3)
    # bf16-operand kernel vs. exact f32 module math: loose (operand rounding only).
    assert jnp.allclose(out_bf16, ref_f32, atol=5e-2, rtol=5e-2)
    # f32-operand kernel path vs. exact f32 module math: near parity.
    assert jnp.allclose(out_f32, ref_f32, atol=1e-2, rtol=1e-2)

    print("KERNEL_OK")
</pallas_src>

<mosaic_0001>
module attributes {stable_mosaic.version = 11 : i64} {
  func.func @_mlp_kernel(%arg0: i32, %arg1: memref<8x16xf32, #tpu.memory_space<vmem>>, %arg2: memref<16x128xbf16, #tpu.memory_space<vmem>>, %arg3: memref<1x128xf32, #tpu.memory_space<vmem>>, %arg4: memref<128x128xbf16, #tpu.memory_space<vmem>>, %arg5: memref<1x128xf32, #tpu.memory_space<vmem>>, %arg6: memref<128x16xbf16, #tpu.memory_space<vmem>>, %arg7: memref<1x16xf32, #tpu.memory_space<vmem>>, %arg8: memref<8x16xf32, #tpu.memory_space<vmem>>) attributes {dimension_semantics = [#tpu.dimension_semantics<parallel>], iteration_bounds = array<i64: 1>, scalar_prefetch = 0 : i64, scratch_operands = 0 : i64, tpu.core_type = #tpu.core_type<tc>, window_params = [{transform_indices = @transform_0, window_bounds = array<i64: 8, 16>}, {pipeline_mode = #tpu.pipeline_mode<synchronous>, transform_indices = @transform_1, window_bounds = array<i64: 16, 128>}, {pipeline_mode = #tpu.pipeline_mode<synchronous>, transform_indices = @transform_2, window_bounds = array<i64: 1, 128>}, {pipeline_mode = #tpu.pipeline_mode<synchronous>, transform_indices = @transform_3, window_bounds = array<i64: 128, 128>}, {pipeline_mode = #tpu.pipeline_mode<synchronous>, transform_indices = @transform_4, window_bounds = array<i64: 1, 128>}, {pipeline_mode = #tpu.pipeline_mode<synchronous>, transform_indices = @transform_5, window_bounds = array<i64: 128, 16>}, {pipeline_mode = #tpu.pipeline_mode<synchronous>, transform_indices = @transform_6, window_bounds = array<i64: 1, 16>}, {transform_indices = @transform_7, window_bounds = array<i64: 8, 16>}]} {
    %c0 = arith.constant 0 : index
    %c0_0 = arith.constant 0 : index
    %0 = vector.load %arg1[%c0, %c0_0] : memref<8x16xf32, #tpu.memory_space<vmem>>, vector<8x16xf32>
    %1 = arith.truncf %0 : vector<8x16xf32> to vector<8x16xbf16>
    %c0_1 = arith.constant 0 : index
    %c0_2 = arith.constant 0 : index
    %2 = vector.load %arg2[%c0_1, %c0_2] : memref<16x128xbf16, #tpu.memory_space<vmem>>, vector<16x128xbf16>
    %cst = arith.constant dense<0.000000e+00> : vector<8x128xf32>
    %3 = tpu.matmul %1, %2, %cst {dimension_numbers = #tpu.dot_dimension_numbers<[1], [0], [0], [1], [0, 0, 1, 1], [], []>} : vector<8x16xbf16>, vector<16x128xbf16>, vector<8x128xf32> -> vector<8x128xf32>
    %c0_3 = arith.constant 0 : index
    %c0_4 = arith.constant 0 : index
    %4 = vector.load %arg3[%c0_3, %c0_4] : memref<1x128xf32, #tpu.memory_space<vmem>>, vector<1x128xf32>
    %5 = vector.broadcast %4 : vector<1x128xf32> to vector<8x128xf32>
    %6 = arith.addf %3, %5 : vector<8x128xf32>
    %cst_5 = arith.constant 2.000000e-01 : f32
    %7 = vector.broadcast %cst_5 : f32 to vector<8x128xf32>
    %8 = arith.mulf %7, %6 : vector<8x128xf32>
    %9 = arith.maximumf %6, %8 : vector<8x128xf32>
    %10 = arith.truncf %9 : vector<8x128xf32> to vector<8x128xbf16>
    %c0_6 = arith.constant 0 : index
    %c0_7 = arith.constant 0 : index
    %11 = vector.load %arg4[%c0_6, %c0_7] : memref<128x128xbf16, #tpu.memory_space<vmem>>, vector<128x128xbf16>
    %cst_8 = arith.constant dense<0.000000e+00> : vector<8x128xf32>
    %12 = tpu.matmul %10, %11, %cst_8 {dimension_numbers = #tpu.dot_dimension_numbers<[1], [0], [0], [1], [0, 0, 1, 1], [], []>} : vector<8x128xbf16>, vector<128x128xbf16>, vector<8x128xf32> -> vector<8x128xf32>
    %c0_9 = arith.constant 0 : index
    %c0_10 = arith.constant 0 : index
    %13 = vector.load %arg5[%c0_9, %c0_10] : memref<1x128xf32, #tpu.memory_space<vmem>>, vector<1x128xf32>
    %14 = vector.broadcast %13 : vector<1x128xf32> to vector<8x128xf32>
    %15 = arith.addf %12, %14 : vector<8x128xf32>
    %cst_11 = arith.constant 2.000000e-01 : f32
    %16 = vector.broadcast %cst_11 : f32 to vector<8x128xf32>
    %17 = arith.mulf %16, %15 : vector<8x128xf32>
    %18 = arith.maximumf %15, %17 : vector<8x128xf32>
    %19 = arith.truncf %18 : vector<8x128xf32> to vector<8x128xbf16>
    %c0_12 = arith.constant 0 : index
    %c0_13 = arith.constant 0 : index
    %20 = vector.load %arg6[%c0_12, %c0_13] : memref<128x16xbf16, #tpu.memory_space<vmem>>, vector<128x16xbf16>
    %cst_14 = arith.constant dense<0.000000e+00> : vector<8x16xf32>
    %21 = tpu.matmul %19, %20, %cst_14 {dimension_numbers = #tpu.dot_dimension_numbers<[1], [0], [0], [1], [0, 0, 1, 1], [], []>} : vector<8x128xbf16>, vector<128x16xbf16>, vector<8x16xf32> -> vector<8x16xf32>
    %c0_15 = arith.constant 0 : index
    %c0_16 = arith.constant 0 : index
    %22 = vector.load %arg7[%c0_15, %c0_16] : memref<1x16xf32, #tpu.memory_space<vmem>>, vector<1x16xf32>
    %23 = vector.broadcast %22 : vector<1x16xf32> to vector<8x16xf32>
    %24 = arith.addf %21, %23 : vector<8x16xf32>
    %c0_17 = arith.constant 0 : index
    %c0_18 = arith.constant 0 : index
    %25 = vector.load %arg8[%c0_17, %c0_18] : memref<8x16xf32, #tpu.memory_space<vmem>>, vector<8x16xf32>
    tpu.vector_store %arg8[%c0_17, %c0_18], %24 {strides = array<i32>} : memref<8x16xf32, #tpu.memory_space<vmem>>, vector<8x16xf32>,
    return
  }
  func.func @transform_0(%arg0: i32) -> (i32, i32) {
    %c0_i32 = arith.constant 0 : i32
    %c0_i32_0 = arith.constant 0 : i32
    return %arg0, %c0_i32 : i32, i32
  }
  func.func @transform_1(%arg0: i32) -> (i32, i32) {
    %c0_i32 = arith.constant 0 : i32
    %c0_i32_0 = arith.constant 0 : i32
    %c0_i32_1 = arith.constant 0 : i32
    return %c0_i32, %c0_i32_0 : i32, i32
  }
  func.func @transform_2(%arg0: i32) -> (i32, i32) {
    %c0_i32 = arith.constant 0 : i32
    %c0_i32_0 = arith.constant 0 : i32
    %c0_i32_1 = arith.constant 0 : i32
    return %c0_i32, %c0_i32_0 : i32, i32
  }
  func.func @transform_3(%arg0: i32) -> (i32, i32) {
    %c0_i32 = arith.constant 0 : i32
    %c0_i32_0 = arith.constant 0 : i32
    %c0_i32_1 = arith.constant 0 : i32
    return %c0_i32, %c0_i32_0 : i32, i32
  }
  func.func @transform_4(%arg0: i32) -> (i32, i32) {
    %c0_i32 = arith.constant 0 : i32
    %c0_i32_0 = arith.constant 0 : i32
    %c0_i32_1 = arith.constant 0 : i32
    return %c0_i32, %c0_i32_0 : i32, i32
  }
  func.func @transform_5(%arg0: i32) -> (i32, i32) {
    %c0_i32 = arith.constant 0 : i32
    %c0_i32_0 = arith.constant 0 : i32
    %c0_i32_1 = arith.constant 0 : i32
    return %c0_i32, %c0_i32_0 : i32, i32
  }
  func.func @transform_6(%arg0: i32) -> (i32, i32) {
    %c0_i32 = arith.constant 0 : i32
    %c0_i32_0 = arith.constant 0 : i32
    %c0_i32_1 = arith.constant 0 : i32
    return %c0_i32, %c0_i32_0 : i32, i32
  }
  func.func @transform_7(%arg0: i32) -> (i32, i32) {
    %c0_i32 = arith.constant 0 : i32
    %c0_i32_0 = arith.constant 0 : i32
    return %arg0, %c0_i32 : i32, i32
  }
}

module attributes {stable_mosaic.version = 11 : i64} {
  func.func @_mlp_kernel(%arg0: i32, %arg1: memref<8x16xf32, #tpu.memory_space<vmem>>, %arg2: memref<16x128xbf16, #tpu.memory_space<vmem>>, %arg3: memref<1x128xf32, #tpu.memory_space<vmem>>, %arg4: memref<128x128xbf16, #tpu.memory_space<vmem>>, %arg5: memref<1x128xf32, #tpu.memory_space<vmem>>, %arg6: memref<128x16xbf16, #tpu.memory_space<vmem>>, %arg7: memref<1x16xf32, #tpu.memory_space<vmem>>, %arg8: memref<8x16xf32, #tpu.memory_space<vmem>>) attributes {dimension_semantics = [#tpu.dimension_semantics<parallel>], iteration_bounds = array<i64: 1>, scalar_prefetch = 0 : i64, scratch_operands = 0 : i64, tpu.core_type = #tpu.core_type<tc>, window_params = [{transform_indices = @transform_0, window_bounds = array<i64: 8, 16>}, {pipeline_mode = #tpu.pipeline_mode<synchronous>, transform_indices = @transform_1, window_bounds = array<i64: 16, 128>}, {pipeline_mode = #tpu.pipeline_mode<synchronous>, transform_indices = @transform_2, window_bounds = array<i64: 1, 128>}, {pipeline_mode = #tpu.pipeline_mode<synchronous>, transform_indices = @transform_3, window_bounds = array<i64: 128, 128>}, {pipeline_mode = #tpu.pipeline_mode<synchronous>, transform_indices = @transform_4, window_bounds = array<i64: 1, 128>}, {pipeline_mode = #tpu.pipeline_mode<synchronous>, transform_indices = @transform_5, window_bounds = array<i64: 128, 16>}, {pipeline_mode = #tpu.pipeline_mode<synchronous>, transform_indices = @transform_6, window_bounds = array<i64: 1, 16>}, {transform_indices = @transform_7, window_bounds = array<i64: 8, 16>}]} {
    %c0 = arith.constant 0 : index
    %c0_0 = arith.constant 0 : index
    %0 = vector.load %arg1[%c0, %c0_0] : memref<8x16xf32, #tpu.memory_space<vmem>>, vector<8x16xf32>
    %1 = arith.truncf %0 : vector<8x16xf32> to vector<8x16xbf16>
    %c0_1 = arith.constant 0 : index
    %c0_2 = arith.constant 0 : index
    %2 = vector.load %arg2[%c0_1, %c0_2] : memref<16x128xbf16, #tpu.memory_space<vmem>>, vector<16x128xbf16>
    %cst = arith.constant dense<0.000000e+00> : vector<8x128xf32>
    %3 = tpu.matmul %1, %2, %cst {dimension_numbers = #tpu.dot_dimension_numbers<[1], [0], [0], [1], [0, 0, 1, 1], [], []>} : vector<8x16xbf16>, vector<16x128xbf16>, vector<8x128xf32> -> vector<8x128xf32>
    %c0_3 = arith.constant 0 : index
    %c0_4 = arith.constant 0 : index
    %4 = vector.load %arg3[%c0_3, %c0_4] : memref<1x128xf32, #tpu.memory_space<vmem>>, vector<1x128xf32>
    %5 = vector.broadcast %4 : vector<1x128xf32> to vector<8x128xf32>
    %6 = arith.addf %3, %5 : vector<8x128xf32>
    %cst_5 = arith.constant 2.000000e-01 : f32
    %7 = vector.broadcast %cst_5 : f32 to vector<8x128xf32>
    %8 = arith.mulf %7, %6 : vector<8x128xf32>
    %9 = arith.maximumf %6, %8 : vector<8x128xf32>
    %10 = arith.truncf %9 : vector<8x128xf32> to vector<8x128xbf16>
    %c0_6 = arith.constant 0 : index
    %c0_7 = arith.constant 0 : index
    %11 = vector.load %arg4[%c0_6, %c0_7] : memref<128x128xbf16, #tpu.memory_space<vmem>>, vector<128x128xbf16>
    %cst_8 = arith.constant dense<0.000000e+00> : vector<8x128xf32>
    %12 = tpu.matmul %10, %11, %cst_8 {dimension_numbers = #tpu.dot_dimension_numbers<[1], [0], [0], [1], [0, 0, 1, 1], [], []>} : vector<8x128xbf16>, vector<128x128xbf16>, vector<8x128xf32> -> vector<8x128xf32>
    %c0_9 = arith.constant 0 : index
    %c0_10 = arith.constant 0 : index
    %13 = vector.load %arg5[%c0_9, %c0_10] : memref<1x128xf32, #tpu.memory_space<vmem>>, vector<1x128xf32>
    %14 = vector.broadcast %13 : vector<1x128xf32> to vector<8x128xf32>
    %15 = arith.addf %12, %14 : vector<8x128xf32>
    %cst_11 = arith.constant 2.000000e-01 : f32
    %16 = vector.broadcast %cst_11 : f32 to vector<8x128xf32>
    %17 = arith.mulf %16, %15 : vector<8x128xf32>
    %18 = arith.maximumf %15, %17 : vector<8x128xf32>
    %19 = arith.truncf %18 : vector<8x128xf32> to vector<8x128xbf16>
    %c0_12 = arith.constant 0 : index
    %c0_13 = arith.constant 0 : index
    %20 = vector.load %arg6[%c0_12, %c0_13] : memref<128x16xbf16, #tpu.memory_space<vmem>>, vector<128x16xbf16>
    %cst_14 = arith.constant dense<0.000000e+00> : vector<8x16xf32>
    %21 = tpu.matmul %19, %20, %cst_14 {dimension_numbers = #tpu.dot_dimension_numbers<[1], [0], [0], [1], [0, 0, 1, 1], [], []>} : vector<8x128xbf16>, vector<128x16xbf16>, vector<8x16xf32> -> vector<8x16xf32>
    %c0_15 = arith.constant 0 : index
    %c0_16 = arith.constant 0 : index
    %22 = vector.load %arg7[%c0_15, %c0_16] : memref<1x16xf32, #tpu.memory_space<vmem>>, vector<1x16xf32>
    %23 = vector.broadcast %22 : vector<1x16xf32> to vector<8x16xf32>
    %24 = arith.addf %21, %23 : vector<8x16xf32>
    %c0_17 = arith.constant 0 : index
    %c0_18 = arith.constant 0 : index
    %25 = vector.load %arg8[%c0_17, %c0_18] : memref<8x16xf32, #tpu.memory_space<vmem>>, vector<8x16xf32>
    tpu.vector_store %arg8[%c0_17, %c0_18], %24 {strides = array<i32>} : memref<8x16xf32, #tpu.memory_space<vmem>>, vector<8x16xf32>,
    return
  }
  func.func @transform_0(%arg0: i32) -> (i32, i32) {
    %c0_i32 = arith.constant 0 : i32
    %c0_i32_0 = arith.constant 0 : i32
    return %arg0, %c0_i32 : i32, i32
  }
  func.func @transform_1(%arg0: i32) -> (i32, i32) {
    %c0_i32 = arith.constant 0 : i32
    %c0_i32_0 = arith.constant 0 : i32
    %c0_i32_1 = arith.constant 0 : i32
    return %c0_i32, %c0_i32_0 : i32, i32
  }
  func.func @transform_2(%arg0: i32) -> (i32, i32) {
    %c0_i32 = arith.constant 0 : i32
    %c0_i32_0 = arith.constant 0 : i32
    %c0_i32_1 = arith.constant 0 : i32
    return %c0_i32, %c0_i32_0 : i32, i32
  }
  func.func @transform_3(%arg0: i32) -> (i32, i32) {
    %c0_i32 = arith.constant 0 : i32
    %c0_i32_0 = arith.constant 0 : i32
    %c0_i32_1 = arith.constant 0 : i32
    return %c0_i32, %c0_i32_0 : i32, i32
  }
  func.func @transform_4(%arg0: i32) -> (i32, i32) {
    %c0_i32 = arith.constant 0 : i32
    %c0_i32_0 = arith.constant 0 : i32
    %c0_i32_1 = arith.constant 0 : i32
    return %c0_i32, %c0_i32_0 : i32, i32
  }
  func.func @transform_5(%arg0: i32) -> (i32, i32) {
    %c0_i32 = arith.constant 0 : i32
    %c0_i32_0 = arith.constant 0 : i32
    %c0_i32_1 = arith.constant 0 : i32
    return %c0_i32, %c0_i32_0 : i32, i32
  }
  func.func @transform_6(%arg0: i32) -> (i32, i32) {
    %c0_i32 = arith.constant 0 : i32
    %c0_i32_0 = arith.constant 0 : i32
    %c0_i32_1 = arith.constant 0 : i32
    return %c0_i32, %c0_i32_0 : i32, i32
  }
  func.func @transform_7(%arg0: i32) -> (i32, i32) {
    %c0_i32 = arith.constant 0 : i32
    %c0_i32_0 = arith.constant 0 : i32
    return %arg0, %c0_i32 : i32, i32
  }
}

</mosaic_0001>

<llo_original>
// kernel: _forward_impl.1
$region0: #{_forward_impl.1}
  #allocation0 [shape = 'u32[]', space=smem, size = 0x4, offset = 0x4, fixed_abs, tag = 'smem constant byte address 0x4 - core index']
  #allocation1 [shape = 'u32[72,128]{1,0:T(1,128)}', space=vmem, size = 0x9000, scoped, tag = 'internal scratch']
  %s0 = inlined_call_operand.vmem [shape: f32[8,16], index: 0, kind: input, shape index: {}]
  %s1 = inlined_call_operand.hbm [shape: bf16[16,128], index: 1, kind: input, shape index: {}]
  %s2 = inlined_call_operand.vmem [shape: f32[1,128], index: 2, kind: input, shape index: {}]
  %s3 = inlined_call_operand.vmem [shape: bf16[128,128], index: 3, kind: input, shape index: {}]
  %s4 = inlined_call_operand.vmem [shape: f32[1,128], index: 4, kind: input, shape index: {}]
  %s5 = inlined_call_operand.vmem [shape: bf16[128,16], index: 5, kind: input, shape index: {}]
  %s6 = inlined_call_operand.vmem [shape: f32[1,16], index: 6, kind: input, shape index: {}]
  %s7 = inlined_call_operand.hbm [shape: f32[8,16], index: 7, kind: output, shape index: {}]
  %s8 = sld [smem:[#allocation0]]
  $region42: #{_forward_impl.1} parent=0
    _
  %s10 = ssub.s32 1, %s8
  %s11 = scalar_select 0, %s10, %s8
  $region1: #{_forward_impl.1} parent=0
    #allocation2 [shape = 'u8[4096]{0}', space=vmem, size = 0x1000, scoped, tag = 'input window, operand 1, single buffered']
    #allocation3 [shape = 's32[1]{0}', space=sflag, size = 0x4, scoped, tag = 'scoped memory for _forward_impl.1']
    #allocation4 [shape = 's32[1]{0}', space=sflag, size = 0x4, scoped, tag = 'scoped memory for _forward_impl.1']
    #allocation5 [shape = 'u8[4096]{0}', space=vmem, size = 0x1000, scoped, tag = 'output window, operand 0, single buffered']
    %12 = vsyncpa [#allocation3], 0
    %13 = vsyncpa [#allocation4], 0
    // Predicated region
    $region2: #{_forward_impl.1} parent=1 // pred_check
      _
    $region3: #{_forward_impl.1} parent=1 // pred_check_branch
      %15 = sbr.rel (0) target = $region5
    $region4: #{_forward_impl.1} parent=1 // pred_region
      _
    $region5: #{_forward_impl.1} parent=1 // pred_fallthru
      _
    // Predicated region
    $region6: #{_forward_impl.1} parent=1 // pred_check
      _
    $region7: #{_forward_impl.1} parent=1 // pred_check_branch
      %17 = sbr.rel (0) target = $region9
    $region8: #{_forward_impl.1} parent=1 // pred_region
      %19 = vsyncadd [#allocation3], 0
      %s20 = sshll.u32 %s1, 4
      %s21 = int_to_ptr.hbm [resolvable:$true] %s20
      %s22 = sshll.u32 [#allocation2], 4
      %s23 = int_to_ptr.vmem [resolvable:$true] %s22
      %28 = dma.hbm_to_vmem [thread:$0]  %s21, 128, %s23, [#allocation3], 64, 64, 4
    $region9: #{_forward_impl.1} parent=1 // pred_fallthru
      _
    // Predicated region
    $region10: #{_forward_impl.1} parent=1 // pred_check
      _
    $region11: #{_forward_impl.1} parent=1 // pred_check_branch
      %30 = sbr.rel (0) target = $region13
    $region12: #{_forward_impl.1} parent=1 // pred_region
      _
    $region13: #{_forward_impl.1} parent=1 // pred_fallthru
      _
    // Predicated region
    $region14: #{_forward_impl.1} parent=1 // pred_check
      _
    $region15: #{_forward_impl.1} parent=1 // pred_check_branch
      %32 = sbr.rel (0) target = $region17
    $region16: #{_forward_impl.1} parent=1 // pred_region
      _
    $region17: #{_forward_impl.1} parent=1 // pred_fallthru
      _
    // Predicated region
    $region18: #{_forward_impl.1} parent=1 // pred_check
      _
    $region19: #{_forward_impl.1} parent=1 // pred_check_branch
      %34 = sbr.rel (0) target = $region21
    $region20: #{_forward_impl.1} parent=1 // pred_region
      _
    $region21: #{_forward_impl.1} parent=1 // pred_fallthru
      _
    // Predicated region
    $region22: #{_forward_impl.1} parent=1 // pred_check
      _
    $region23: #{_forward_impl.1} parent=1 // pred_check_branch
      %36 = sbr.rel (0) target = $region25
    $region24: #{_forward_impl.1} parent=1 // pred_region
      _
    $region25: #{_forward_impl.1} parent=1 // pred_fallthru
      _
    // Predicated region
    $region26: #{_forward_impl.1} parent=1 // pred_check
      _
    $region27: #{_forward_impl.1} parent=1 // pred_check_branch
      %38 = sbr.rel (0) target = $region29
    $region28: #{_forward_impl.1} parent=1 // pred_region
      _
    $region29: #{_forward_impl.1} parent=1 // pred_fallthru
      _
    // Predicated region
    $region30: #{_forward_impl.1} parent=1 // pred_check
      _
    $region31: #{_forward_impl.1} parent=1 // pred_check_branch
      %40 = sbr.rel (0) target = $region33
    $region32: #{_forward_impl.1} parent=1 // pred_region
      %42 = dma.done [#allocation3], 128
    $region33: #{_forward_impl.1} parent=1 // pred_fallthru
      _
    %v44 = vld [vmem:[%s0] sm:$0xff]
    %v45 = vpack.c.bf16 %v44, %v44
    %v46 = vld [vmem:[#allocation2] sm:$0xf]
    %v47 = vld [vmem:[#allocation2 + $0x4] sm:$0xf]
    %v48 = vld [vmem:[%s2] sm:$0x1]
    %v50 = vperm.slane %v48, 0
    %v54 = vunpack.c.l.b16 %v46
    %v55 = vunpack.c.l.b16 %v47
    %v56 = vpack.c.b16 %v55, %v54
    %vm58 = vcmask 130048
    %v60 = vsel %vm58, %v45, 0
    %62 = vmatpush.bf16.msra.mxu0 0
    %63 = vmatpush.bf16.msra.mxu0 0
    %64 = vmatpush.bf16.msra.mxu0 0
    %65 = vmatpush.bf16.msra.mxu0 0
    %66 = vmatpush.bf16.msra.mxu0 0
    %67 = vmatpush.bf16.msra.mxu0 0
    %68 = vmatpush.bf16.msra.mxu0 0
    %69 = vmatpush.bf16.msra.mxu0 %v56
    %70 = vmatmul.bf16.gmra.mxu0 %v60
    %v71 = vpop.f32.mrf.mxu0
    %v72 = vadd.f32 %v50, %v71
    %v73 = vpop.f32.mrf.mxu0
    %74 = vdwg.mxu0
    %v75 = vmul.f32 %v72, 0.2
    %v76 = vmax.f32 %v72, %v75
    %v77 = vpack.c.bf16 %v76, %v76
    %v78 = vld [vmem:[%s3] sm:$0xf]
    %v79 = vld [vmem:[%s3 + $0x4] sm:$0xf]
    %v80 = vld [vmem:[%s3 + $0x8] sm:$0xf]
    %v81 = vld [vmem:[%s3 + $0xc] sm:$0xf]
    %v82 = vld [vmem:[%s3 + $0x10] sm:$0xf]
    %v83 = vld [vmem:[%s3 + $0x14] sm:$0xf]
    %v84 = vld [vmem:[%s3 + $0x18] sm:$0xf]
    %v85 = vld [vmem:[%s3 + $0x1c] sm:$0xf]
    %v86 = vld [vmem:[%s3 + $0x20] sm:$0xf]
    %v87 = vld [vmem:[%s3 + $0x24] sm:$0xf]
    %v88 = vld [vmem:[%s3 + $0x28] sm:$0xf]
    %v89 = vld [vmem:[%s3 + $0x2c] sm:$0xf]
    %v90 = vld [vmem:[%s3 + $0x30] sm:$0xf]
    %v91 = vld [vmem:[%s3 + $0x34] sm:$0xf]
    %v92 = vld [vmem:[%s3 + $0x38] sm:$0xf]
    %v93 = vld [vmem:[%s3 + $0x3c] sm:$0xf]
    %v94 = vld [vmem:[%s4] sm:$0x1]
    %v96 = vperm.slane %v94, 0
    %v114 = vunpack.c.l.b16 %v78
    %v115 = vunpack.c.l.b16 %v79
    %v116 = vunpack.c.l.b16 %v80
    %v117 = vunpack.c.l.b16 %v81
    %v118 = vunpack.c.l.b16 %v82
    %v119 = vunpack.c.l.b16 %v83
    %v120 = vunpack.c.l.b16 %v84
    %v121 = vunpack.c.l.b16 %v85
    %v122 = vunpack.c.l.b16 %v86
    %v123 = vunpack.c.l.b16 %v87
    %v124 = vunpack.c.l.b16 %v88
    %v125 = vunpack.c.l.b16 %v89
    %v126 = vunpack.c.l.b16 %v90
    %v127 = vunpack.c.l.b16 %v91
    %v128 = vunpack.c.l.b16 %v92
    %v129 = vunpack.c.l.b16 %v93
    %v130 = vpack.c.b16 %v115, %v114
    %v131 = vpack.c.b16 %v117, %v116
    %v132 = vpack.c.b16 %v119, %v118
    %v133 = vpack.c.b16 %v121, %v120
    %v134 = vpack.c.b16 %v123, %v122
    %v135 = vpack.c.b16 %v125, %v124
    %v136 = vpack.c.b16 %v127, %v126
    %v137 = vpack.c.b16 %v129, %v128
    %146 = vmatpush.bf16.msra.mxu0 %v137
    %147 = vmatpush.bf16.msra.mxu0 %v136
    %148 = vmatpush.bf16.msra.mxu0 %v135
    %149 = vmatpush.bf16.msra.mxu0 %v134
    %150 = vmatpush.bf16.msra.mxu0 %v133
    %151 = vmatpush.bf16.msra.mxu0 %v132
    %152 = vmatpush.bf16.msra.mxu0 %v131
    %153 = vmatpush.bf16.msra.mxu0 %v130
    %154 = vmatmul.bf16.gmra.mxu0 %v77
    %v155 = vpop.f32.mrf.mxu0
    %v156 = vadd.f32 %v96, %v155
    %v157 = vpop.f32.mrf.mxu0
    %158 = vdwg.mxu0
    %v159 = vmul.f32 %v156, 0.2
    %v160 = vmax.f32 %v156, %v159
    %v161 = vpack.c.bf16 %v160, %v160
    %v162 = vld [vmem:[%s5] sm:$0xf]
    %v163 = vld [vmem:[%s5 + $0x4] sm:$0xf]
    %v164 = vld [vmem:[%s5 + $0x8] sm:$0xf]
    %v165 = vld [vmem:[%s5 + $0xc] sm:$0xf]
    %v166 = vld [vmem:[%s5 + $0x10] sm:$0xf]
    %v167 = vld [vmem:[%s5 + $0x14] sm:$0xf]
    %v168 = vld [vmem:[%s5 + $0x18] sm:$0xf]
    %v169 = vld [vmem:[%s5 + $0x1c] sm:$0xf]
    %v170 = vld [vmem:[%s5 + $0x20] sm:$0xf]
    %v171 = vld [vmem:[%s5 + $0x24] sm:$0xf]
    %v172 = vld [vmem:[%s5 + $0x28] sm:$0xf]
    %v173 = vld [vmem:[%s5 + $0x2c] sm:$0xf]
    %v174 = vld [vmem:[%s5 + $0x30] sm:$0xf]
    %v175 = vld [vmem:[%s5 + $0x34] sm:$0xf]
    %v176 = vld [vmem:[%s5 + $0x38] sm:$0xf]
    %v177 = vld [vmem:[%s5 + $0x3c] sm:$0xf]
    %v178 = vld [vmem:[%s6] sm:$0x1]
    %v180 = vperm.slane %v178, 0
    %v198 = vunpack.c.l.b16 %v162
    %v199 = vunpack.c.l.b16 %v163
    %v200 = vunpack.c.l.b16 %v164
    %v201 = vunpack.c.l.b16 %v165
    %v202 = vunpack.c.l.b16 %v166
    %v203 = vunpack.c.l.b16 %v167
    %v204 = vunpack.c.l.b16 %v168
    %v205 = vunpack.c.l.b16 %v169
    %v206 = vunpack.c.l.b16 %v170
    %v207 = vunpack.c.l.b16 %v171
    %v208 = vunpack.c.l.b16 %v172
    %v209 = vunpack.c.l.b16 %v173
    %v210 = vunpack.c.l.b16 %v174
    %v211 = vunpack.c.l.b16 %v175
    %v212 = vunpack.c.l.b16 %v176
    %v213 = vunpack.c.l.b16 %v177
    %v214 = vpack.c.b16 %v199, %v198
    %v215 = vpack.c.b16 %v201, %v200
    %v216 = vpack.c.b16 %v203, %v202
    %v217 = vpack.c.b16 %v205, %v204
    %v218 = vpack.c.b16 %v207, %v206
    %v219 = vpack.c.b16 %v209, %v208
    %v220 = vpack.c.b16 %v211, %v210
    %v221 = vpack.c.b16 %v213, %v212
    %230 = vmatpush.bf16.msra.mxu0 %v221
    %231 = vmatpush.bf16.msra.mxu0 %v220
    %232 = vmatpush.bf16.msra.mxu0 %v219
    %233 = vmatpush.bf16.msra.mxu0 %v218
    %234 = vmatpush.bf16.msra.mxu0 %v217
    %235 = vmatpush.bf16.msra.mxu0 %v216
    %236 = vmatpush.bf16.msra.mxu0 %v215
    %237 = vmatpush.bf16.msra.mxu0 %v214
    %238 = vmatmul.bf16.gmra.mxu0 %v161
    %v239 = vpop.f32.mrf.mxu0
    %v240 = vadd.f32 %v180, %v239
    %v241 = vpop.f32.mrf.mxu0
    %242 = vdwg.mxu0
    %243 = vst.msk [vmem:[#allocation5] sm:$0xff] %vm58, %v240
    // Predicated region
    $region34: #{_forward_impl.1} parent=1 // pred_check
      _
    $region35: #{_forward_impl.1} parent=1 // pred_check_branch
      %245 = sbr.rel (0) target = $region37
    $region36: #{_forward_impl.1} parent=1 // pred_region
      %247 = vsyncadd [#allocation4], 0
      %s249 = sshll.u32 [#allocation5], 4
      %s250 = int_to_ptr.vmem [resolvable:$true] %s249
      %s251 = sshll.u32 %s7, 4
      %s252 = int_to_ptr.hbm [resolvable:$true] %s251
      %254 = dma.vmem_to_hbm [thread:$0]  %s250, 128, %s252, [#allocation4]
    $region37: #{_forward_impl.1} parent=1 // pred_fallthru
      _
    // Predicated region
    $region38: #{_forward_impl.1} parent=1 // pred_check
      _
    $region39: #{_forward_impl.1} parent=1 // pred_check_branch
      %256 = sbr.rel (0) target = $region41
    $region40: #{_forward_impl.1} parent=1 // pred_region
      %258 = dma.done [#allocation4], 128
    $region41: #{_forward_impl.1} parent=1 // pred_fallthru
      _
    %259 = vsyncpa [#allocation3], 1
    %260 = vsyncpa [#allocation4], 1

// kernel: _forward_impl.1
$region0: #{_forward_impl.1}
  #allocation0 [shape = 'u32[]', space=smem, size = 0x4, offset = 0x4, fixed_abs, tag = 'smem constant byte address 0x4 - core index']
  #allocation1 [shape = 'u32[72,128]{1,0:T(1,128)}', space=vmem, size = 0x9000, scoped, tag = 'internal scratch']
  %s0 = inlined_call_operand.vmem [shape: f32[8,16], index: 0, kind: input, shape index: {}]
  %s1 = inlined_call_operand.hbm [shape: bf16[16,128], index: 1, kind: input, shape index: {}]
  %s2 = inlined_call_operand.vmem [shape: f32[1,128], index: 2, kind: input, shape index: {}]
  %s3 = inlined_call_operand.vmem [shape: bf16[128,128], index: 3, kind: input, shape index: {}]
  %s4 = inlined_call_operand.vmem [shape: f32[1,128], index: 4, kind: input, shape index: {}]
  %s5 = inlined_call_operand.vmem [shape: bf16[128,16], index: 5, kind: input, shape index: {}]
  %s6 = inlined_call_operand.vmem [shape: f32[1,16], index: 6, kind: input, shape index: {}]
  %s7 = inlined_call_operand.hbm [shape: f32[8,16], index: 7, kind: output, shape index: {}]
  %s8 = sld [smem:[#allocation0]]
  $region42: #{_forward_impl.1} parent=0
    _
  %s10 = ssub.s32 1, %s8
  %s11 = scalar_select 0, %s10, %s8
  $region1: #{_forward_impl.1} parent=0
    #allocation2 [shape = 'u8[4096]{0}', space=vmem, size = 0x1000, scoped, tag = 'input window, operand 1, single buffered']
    #allocation3 [shape = 's32[1]{0}', space=sflag, size = 0x4, scoped, tag = 'scoped memory for _forward_impl.1']
    #allocation4 [shape = 's32[1]{0}', space=sflag, size = 0x4, scoped, tag = 'scoped memory for _forward_impl.1']
    #allocation5 [shape = 'u8[4096]{0}', space=vmem, size = 0x1000, scoped, tag = 'output window, operand 0, single buffered']
    %12 = vsyncpa [#allocation3], 0
    %13 = vsyncpa [#allocation4], 0
    // Predicated region
    $region2: #{_forward_impl.1} parent=1 // pred_check
      _
    $region3: #{_forward_impl.1} parent=1 // pred_check_branch
      %15 = sbr.rel (0) target = $region5
    $region4: #{_forward_impl.1} parent=1 // pred_region
      _
    $region5: #{_forward_impl.1} parent=1 // pred_fallthru
      _
    // Predicated region
    $region6: #{_forward_impl.1} parent=1 // pred_check
      _
    $region7: #{_forward_impl.1} parent=1 // pred_check_branch
      %17 = sbr.rel (0) target = $region9
    $region8: #{_forward_impl.1} parent=1 // pred_region
      %19 = vsyncadd [#allocation3], 0
      %s20 = sshll.u32 %s1, 4
      %s21 = int_to_ptr.hbm [resolvable:$true] %s20
      %s22 = sshll.u32 [#allocation2], 4
      %s23 = int_to_ptr.vmem [resolvable:$true] %s22
      %28 = dma.hbm_to_vmem [thread:$0]  %s21, 128, %s23, [#allocation3], 64, 64, 4
    $region9: #{_forward_impl.1} parent=1 // pred_fallthru
      _
    // Predicated region
    $region10: #{_forward_impl.1} parent=1 // pred_check
      _
    $region11: #{_forward_impl.1} parent=1 // pred_check_branch
      %30 = sbr.rel (0) target = $region13
    $region12: #{_forward_impl.1} parent=1 // pred_region
      _
    $region13: #{_forward_impl.1} parent=1 // pred_fallthru
      _
    // Predicated region
    $region14: #{_forward_impl.1} parent=1 // pred_check
      _
    $region15: #{_forward_impl.1} parent=1 // pred_check_branch
      %32 = sbr.rel (0) target = $region17
    $region16: #{_forward_impl.1} parent=1 // pred_region
      _
    $region17: #{_forward_impl.1} parent=1 // pred_fallthru
      _
    // Predicated region
    $region18: #{_forward_impl.1} parent=1 // pred_check
      _
    $region19: #{_forward_impl.1} parent=1 // pred_check_branch
      %34 = sbr.rel (0) target = $region21
    $region20: #{_forward_impl.1} parent=1 // pred_region
      _
    $region21: #{_forward_impl.1} parent=1 // pred_fallthru
      _
    // Predicated region
    $region22: #{_forward_impl.1} parent=1 // pred_check
      _
    $region23: #{_forward_impl.1} parent=1 // pred_check_branch
      %36 = sbr.rel (0) target = $region25
    $region24: #{_forward_impl.1} parent=1 // pred_region
      _
    $region25: #{_forward_impl.1} parent=1 // pred_fallthru
      _
    // Predicated region
    $region26: #{_forward_impl.1} parent=1 // pred_check
      _
    $region27: #{_forward_impl.1} parent=1 // pred_check_branch
      %38 = sbr.rel (0) target = $region29
    $region28: #{_forward_impl.1} parent=1 // pred_region
      _
    $region29: #{_forward_impl.1} parent=1 // pred_fallthru
      _
    // Predicated region
    $region30: #{_forward_impl.1} parent=1 // pred_check
      _
    $region31: #{_forward_impl.1} parent=1 // pred_check_branch
      %40 = sbr.rel (0) target = $region33
    $region32: #{_forward_impl.1} parent=1 // pred_region
      %42 = dma.done [#allocation3], 128
    $region33: #{_forward_impl.1} parent=1 // pred_fallthru
      _
    %v44 = vld [vmem:[%s0] sm:$0xff]
    %v45 = vpack.c.bf16 %v44, %v44
    %v46 = vld [vmem:[#allocation2] sm:$0xf]
    %v47 = vld [vmem:[#allocation2 + $0x4] sm:$0xf]
    %v48 = vld [vmem:[%s2] sm:$0x1]
    %v50 = vperm.slane %v48, 0
    %v54 = vunpack.c.l.b16 %v46
    %v55 = vunpack.c.l.b16 %v47
    %v56 = vpack.c.b16 %v55, %v54
    %vm58 = vcmask 130048
    %v60 = vsel %vm58, %v45, 0
    %62 = vmatpush.bf16.msra.mxu0 0
    %63 = vmatpush.bf16.msra.mxu0 0
    %64 = vmatpush.bf16.msra.mxu0 0
    %65 = vmatpush.bf16.msra.mxu0 0
    %66 = vmatpush.bf16.msra.mxu0 0
    %67 = vmatpush.bf16.msra.mxu0 0
    %68 = vmatpush.bf16.msra.mxu0 0
    %69 = vmatpush.bf16.msra.mxu0 %v56
    %70 = vmatmul.bf16.gmra.mxu0 %v60
    %v71 = vpop.f32.mrf.mxu0
    %v72 = vadd.f32 %v50, %v71
    %v73 = vpop.f32.mrf.mxu0
    %74 = vdwg.mxu0
    %v75 = vmul.f32 %v72, 0.2
    %v76 = vmax.f32 %v72, %v75
    %v77 = vpack.c.bf16 %v76, %v76
    %v78 = vld [vmem:[%s3] sm:$0xf]
    %v79 = vld [vmem:[%s3 + $0x4] sm:$0xf]
    %v80 = vld [vmem:[%s3 + $0x8] sm:$0xf]
    %v81 = vld [vmem:[%s3 + $0xc] sm:$0xf]
    %v82 = vld [vmem:[%s3 + $0x10] sm:$0xf]
    %v83 = vld [vmem:[%s3 + $0x14] sm:$0xf]
    %v84 = vld [vmem:[%s3 + $0x18] sm:$0xf]
    %v85 = vld [vmem:[%s3 + $0x1c] sm:$0xf]
    %v86 = vld [vmem:[%s3 + $0x20] sm:$0xf]
    %v87 = vld [vmem:[%s3 + $0x24] sm:$0xf]
    %v88 = vld [vmem:[%s3 + $0x28] sm:$0xf]
    %v89 = vld [vmem:[%s3 + $0x2c] sm:$0xf]
    %v90 = vld [vmem:[%s3 + $0x30] sm:$0xf]
    %v91 = vld [vmem:[%s3 + $0x34] sm:$0xf]
    %v92 = vld [vmem:[%s3 + $0x38] sm:$0xf]
    %v93 = vld [vmem:[%s3 + $0x3c] sm:$0xf]
    %v94 = vld [vmem:[%s4] sm:$0x1]
    %v96 = vperm.slane %v94, 0
    %v114 = vunpack.c.l.b16 %v78
    %v115 = vunpack.c.l.b16 %v79
    %v116 = vunpack.c.l.b16 %v80
    %v117 = vunpack.c.l.b16 %v81
    %v118 = vunpack.c.l.b16 %v82
    %v119 = vunpack.c.l.b16 %v83
    %v120 = vunpack.c.l.b16 %v84
    %v121 = vunpack.c.l.b16 %v85
    %v122 = vunpack.c.l.b16 %v86
    %v123 = vunpack.c.l.b16 %v87
    %v124 = vunpack.c.l.b16 %v88
    %v125 = vunpack.c.l.b16 %v89
    %v126 = vunpack.c.l.b16 %v90
    %v127 = vunpack.c.l.b16 %v91
    %v128 = vunpack.c.l.b16 %v92
    %v129 = vunpack.c.l.b16 %v93
    %v130 = vpack.c.b16 %v115, %v114
    %v131 = vpack.c.b16 %v117, %v116
    %v132 = vpack.c.b16 %v119, %v118
    %v133 = vpack.c.b16 %v121, %v120
    %v134 = vpack.c.b16 %v123, %v122
    %v135 = vpack.c.b16 %v125, %v124
    %v136 = vpack.c.b16 %v127, %v126
    %v137 = vpack.c.b16 %v129, %v128
    %146 = vmatpush.bf16.msra.mxu0 %v137
    %147 = vmatpush.bf16.msra.mxu0 %v136
    %148 = vmatpush.bf16.msra.mxu0 %v135
    %149 = vmatpush.bf16.msra.mxu0 %v134
    %150 = vmatpush.bf16.msra.mxu0 %v133
    %151 = vmatpush.bf16.msra.mxu0 %v132
    %152 = vmatpush.bf16.msra.mxu0 %v131
    %153 = vmatpush.bf16.msra.mxu0 %v130
    %154 = vmatmul.bf16.gmra.mxu0 %v77
    %v155 = vpop.f32.mrf.mxu0
    %v156 = vadd.f32 %v96, %v155
    %v157 = vpop.f32.mrf.mxu0
    %158 = vdwg.mxu0
    %v159 = vmul.f32 %v156, 0.2
    %v160 = vmax.f32 %v156, %v159
    %v161 = vpack.c.bf16 %v160, %v160
    %v162 = vld [vmem:[%s5] sm:$0xf]
    %v163 = vld [vmem:[%s5 + $0x4] sm:$0xf]
    %v164 = vld [vmem:[%s5 + $0x8] sm:$0xf]
    %v165 = vld [vmem:[%s5 + $0xc] sm:$0xf]
    %v166 = vld [vmem:[%s5 + $0x10] sm:$0xf]
    %v167 = vld [vmem:[%s5 + $0x14] sm:$0xf]
    %v168 = vld [vmem:[%s5 + $0x18] sm:$0xf]
    %v169 = vld [vmem:[%s5 + $0x1c] sm:$0xf]
    %v170 = vld [vmem:[%s5 + $0x20] sm:$0xf]
    %v171 = vld [vmem:[%s5 + $0x24] sm:$0xf]
    %v172 = vld [vmem:[%s5 + $0x28] sm:$0xf]
    %v173 = vld [vmem:[%s5 + $0x2c] sm:$0xf]
    %v174 = vld [vmem:[%s5 + $0x30] sm:$0xf]
    %v175 = vld [vmem:[%s5 + $0x34] sm:$0xf]
    %v176 = vld [vmem:[%s5 + $0x38] sm:$0xf]
    %v177 = vld [vmem:[%s5 + $0x3c] sm:$0xf]
    %v178 = vld [vmem:[%s6] sm:$0x1]
    %v180 = vperm.slane %v178, 0
    %v198 = vunpack.c.l.b16 %v162
    %v199 = vunpack.c.l.b16 %v163
    %v200 = vunpack.c.l.b16 %v164
    %v201 = vunpack.c.l.b16 %v165
    %v202 = vunpack.c.l.b16 %v166
    %v203 = vunpack.c.l.b16 %v167
    %v204 = vunpack.c.l.b16 %v168
    %v205 = vunpack.c.l.b16 %v169
    %v206 = vunpack.c.l.b16 %v170
    %v207 = vunpack.c.l.b16 %v171
    %v208 = vunpack.c.l.b16 %v172
    %v209 = vunpack.c.l.b16 %v173
    %v210 = vunpack.c.l.b16 %v174
    %v211 = vunpack.c.l.b16 %v175
    %v212 = vunpack.c.l.b16 %v176
    %v213 = vunpack.c.l.b16 %v177
    %v214 = vpack.c.b16 %v199, %v198
    %v215 = vpack.c.b16 %v201, %v200
    %v216 = vpack.c.b16 %v203, %v202
    %v217 = vpack.c.b16 %v205, %v204
    %v218 = vpack.c.b16 %v207, %v206
    %v219 = vpack.c.b16 %v209, %v208
    %v220 = vpack.c.b16 %v211, %v210
    %v221 = vpack.c.b16 %v213, %v212
    %230 = vmatpush.bf16.msra.mxu0 %v221
    %231 = vmatpush.bf16.msra.mxu0 %v220
    %232 = vmatpush.bf16.msra.mxu0 %v219
    %233 = vmatpush.bf16.msra.mxu0 %v218
    %234 = vmatpush.bf16.msra.mxu0 %v217
    %235 = vmatpush.bf16.msra.mxu0 %v216
    %236 = vmatpush.bf16.msra.mxu0 %v215
    %237 = vmatpush.bf16.msra.mxu0 %v214
    %238 = vmatmul.bf16.gmra.mxu0 %v161
    %v239 = vpop.f32.mrf.mxu0
    %v240 = vadd.f32 %v180, %v239
    %v241 = vpop.f32.mrf.mxu0
    %242 = vdwg.mxu0
    %243 = vst.msk [vmem:[#allocation5] sm:$0xff] %vm58, %v240
    // Predicated region
    $region34: #{_forward_impl.1} parent=1 // pred_check
      _
    $region35: #{_forward_impl.1} parent=1 // pred_check_branch
      %245 = sbr.rel (0) target = $region37
    $region36: #{_forward_impl.1} parent=1 // pred_region
      %247 = vsyncadd [#allocation4], 0
      %s249 = sshll.u32 [#allocation5], 4
      %s250 = int_to_ptr.vmem [resolvable:$true] %s249
      %s251 = sshll.u32 %s7, 4
      %s252 = int_to_ptr.hbm [resolvable:$true] %s251
      %254 = dma.vmem_to_hbm [thread:$0]  %s250, 128, %s252, [#allocation4]
    $region37: #{_forward_impl.1} parent=1 // pred_fallthru
      _
    // Predicated region
    $region38: #{_forward_impl.1} parent=1 // pred_check
      _
    $region39: #{_forward_impl.1} parent=1 // pred_check_branch
      %256 = sbr.rel (0) target = $region41
    $region40: #{_forward_impl.1} parent=1 // pred_region
      %258 = dma.done [#allocation4], 128
    $region41: #{_forward_impl.1} parent=1 // pred_fallthru
      _
    %259 = vsyncpa [#allocation3], 1
    %260 = vsyncpa [#allocation4], 1

</llo_original>
